<compile_context>
chip_gen: v5e
topology: v5e:2x2
jax: 0.10.0
libtpu: 0.0.40
codegen_flags: <defaults>
</compile_context>

<pallas_src>
import math

import jax
import jax.numpy as jnp
from jax.experimental import pallas as pl
from jax.experimental.pallas import tpu as pltpu

LANE = 128            # lane width (last dim of every block)
MAX_TILE_ROWS = 4096  # 4096*128*4B = 2 MiB per f32 input block


def _sublane_multiple(dtype):
    """Sublane tiling multiple for a dtype: f32 -> 8, bf16 -> 16, i8/bool -> 32."""
    bits = jnp.dtype(dtype).itemsize * 8
    return max(8, 256 // bits)


def _make_focal_kernel(tile_rows, n, needs_mask, gamma_base, beta, alpha):
    full_rows = n // LANE      # lane-rows that are entirely valid
    rem = n % LANE             # valid lanes on the boundary row (0 => none)

    def _partial(loss):
        # VPU tree-add down to one lane-dense (8, LANE) partial per block.
        return loss.reshape(tile_rows // 8, 8, LANE).sum(axis=0)

    def kernel(pred_ref, tgt_ref, out_ref):
        pred = pred_ref[...].astype(jnp.float32)   # (tile_rows, LANE)
        tgt = tgt_ref[...].astype(jnp.float32)

        # Shared EUP terms.
        abs_pred = jnp.abs(pred)
        e = jnp.exp(-abs_pred)          # exp(-|pred|)
        sp = jnp.log1p(e)               # log1p(exp(-|pred|))

        # s = pred if target == 1 else -pred   =>   pt = sigmoid(s)
        is_pos = tgt == 1.0
        s = jnp.where(is_pos, pred, -pred)

        # softplus(s) = max(s, 0) + log1p(exp(-|s|)),  |s| == |pred|.
        softplus_s = jnp.maximum(s, 0.0) + sp

        # 1 - pt = sigmoid(-s) = exp(-softplus(s))   (no divide, no selects).
        one_minus_pt = jnp.exp(-softplus_s)

        # Dynamic gamma (detach is a no-op in the forward pass).
        gamma = gamma_base + beta * one_minus_pt

        # (1 - pt) ** gamma = exp(-gamma * softplus(s)).
        pow_term = jnp.exp(-gamma * softplus_s)

        # alpha*t + (1-alpha)*(1-t)  ==  (1-alpha) + (2*alpha - 1)*t.
        alpha_w = (1.0 - alpha) + (2.0 * alpha - 1.0) * tgt
        focal_weight = alpha_w * pow_term

        # Numerically-stable BCE-with-logits (reduction='none').
        bce = jnp.maximum(pred, 0.0) - pred * tgt + sp

        loss = focal_weight * bce

        # Steady-state path: unmasked, lane-dense store.
        out_ref[...] = _partial(loss)

        if needs_mask:
            # Only the LAST grid block contains padded / stale rows; recompute
            # its partial with the mask and overwrite.  Row compare + lane
            # compare on the boundary row only — stays well within int32.
            @pl.when(pl.program_id(0) == pl.num_programs(0) - 1)
            def _():
                i = pl.program_id(0)
                row = (jax.lax.broadcasted_iota(jnp.int32, (tile_rows, LANE), 0)
                       + i * tile_rows)
                valid = row < full_rows
                if rem:
                    lane = jax.lax.broadcasted_iota(
                        jnp.int32, (tile_rows, LANE), 1)
                    valid = valid | ((row == full_rows) & (lane < rem))
                out_ref[...] = _partial(jnp.where(valid, loss, 0.0))

    return kernel


def dynamic_focal_loss(pred, target, gamma_base=2.0, beta=5.0, alpha=0.25):
    assert pred.shape == target.shape
    n = pred.size
    rem = n % LANE

    # Flatten row-major into a lane-dense (rows, 128) slab IN THE ORIGINAL
    # dtype (bf16 pred / int8 target flow through the DMA un-upcast).  Free
    # reshape when n is a multiple of 128.
    # TODO(synk): for n % 128 != 0 jnp.pad still copies the flat array once.
    def prep(x):
        flat = x.reshape(-1)
        if rem:
            flat = jnp.pad(flat, (0, LANE - rem))
        return flat.reshape(-1, LANE)

    pred2 = prep(pred)
    tgt2 = prep(target)
    rows = pred2.shape[0]

    # Sublane multiple: must satisfy the stricter of the two input dtypes.
    sub = max(_sublane_multiple(pred2.dtype), _sublane_multiple(tgt2.dtype))

    # Aim for >= 2 grid blocks (feeds both v7x TensorCores), capped at
    # MAX_TILE_ROWS; round up to the sublane multiple.
    half_rows = -(-rows // 2)
    tile_rows = min(MAX_TILE_ROWS, -(-half_rows // sub) * sub)
    tile_rows = max(tile_rows, sub)
    num_blocks = pl.cdiv(rows, tile_rows)
    needs_mask = (num_blocks * tile_rows * LANE) != n

    kernel = _make_focal_kernel(tile_rows, n, needs_mask,
                                float(gamma_base), float(beta), float(alpha))

    # VMEM budget: 2 inputs x 2 pipeline buffers x block_bytes + out + slack.
    in_block_bytes = tile_rows * LANE * (pred2.dtype.itemsize
                                         + tgt2.dtype.itemsize)
    vmem_limit = int(2 * in_block_bytes + 2 * 8 * LANE * 4 + (4 << 20))

    in_bytes = pred2.size * pred2.dtype.itemsize + tgt2.size * tgt2.dtype.itemsize
    out_bytes = num_blocks * 8 * LANE * 4
    cost = pl.CostEstimate(flops=20 * n, transcendentals=4 * n,
                           bytes_accessed=in_bytes + out_bytes)

    partials = pl.pallas_call(
        kernel,
        out_shape=jax.ShapeDtypeStruct((num_blocks * 8, LANE), jnp.float32),
        grid=(num_blocks,),
        in_specs=[
            # If profiling shows exposed DMA, add pipeline_mode=pl.Buffered(3).
            pl.BlockSpec((tile_rows, LANE), lambda i: (i, 0)),
            pl.BlockSpec((tile_rows, LANE), lambda i: (i, 0)),
        ],
        out_specs=pl.BlockSpec((8, LANE), lambda i: (i, 0)),
        compiler_params=pltpu.CompilerParams(
            dimension_semantics=("parallel",),
            vmem_limit_bytes=vmem_limit),
        cost_estimate=cost,
    )(pred2, tgt2)

    return jnp.sum(partials) / jnp.float32(n)


def _reference_loss(pred, target, gamma_base=2.0, beta=5.0, alpha=0.25):
    pred = pred.astype(jnp.float32)
    target = target.astype(jnp.float32)
    p = jax.nn.sigmoid(pred)
    pt = jnp.where(target == 1.0, p, 1.0 - p)
    gamma = gamma_base + beta * (1.0 - pt)
    fw = (alpha * target + (1.0 - alpha) * (1.0 - target)) * (1.0 - pt) ** gamma
    bce = jnp.maximum(pred, 0.0) - pred * target + jnp.log1p(jnp.exp(-jnp.abs(pred)))
    return jnp.mean(fw * bce)


if __name__ == "__main__":
    key = jax.random.PRNGKey(0)
    kp, kt = jax.random.split(key)
    # NCHW-style logits and binary targets, small shapes.
    pred = jax.random.normal(kp, (2, 4, 16, 16), dtype=jnp.float32)
    target = jax.random.bernoulli(kt, p=0.3, shape=(2, 4, 16, 16)).astype(jnp.float32)

    loss = dynamic_focal_loss(pred, target)
    loss = jax.block_until_ready(loss)

    ref = _reference_loss(pred, target)
    assert jnp.allclose(loss, ref, rtol=1e-4, atol=1e-6), (loss, ref)
    print("KERNEL_OK")
</pallas_src>

<mosaic_0001>
module attributes {stable_mosaic.version = 11 : i64} {
  func.func @kernel(%arg0: i32, %arg1: memref<8x128xf32, #tpu.memory_space<vmem>>, %arg2: memref<8x128xf32, #tpu.memory_space<vmem>>, %arg3: memref<8x128xf32, #tpu.memory_space<vmem>>) attributes {dimension_semantics = [#tpu.dimension_semantics<parallel>], iteration_bounds = array<i64: 2>, scalar_prefetch = 0 : i64, scratch_operands = 0 : i64, tpu.core_type = #tpu.core_type<tc>, window_params = [{transform_indices = @transform_0, window_bounds = array<i64: 8, 128>}, {transform_indices = @transform_1, window_bounds = array<i64: 8, 128>}, {transform_indices = @transform_2, window_bounds = array<i64: 8, 128>}]} {
    %c0 = arith.constant 0 : index
    %c0_0 = arith.constant 0 : index
    %0 = vector.load %arg1[%c0, %c0_0] : memref<8x128xf32, #tpu.memory_space<vmem>>, vector<8x128xf32>
    %c0_1 = arith.constant 0 : index
    %c0_2 = arith.constant 0 : index
    %1 = vector.load %arg2[%c0_1, %c0_2] : memref<8x128xf32, #tpu.memory_space<vmem>>, vector<8x128xf32>
    %2 = math.absf %0 : vector<8x128xf32>
    %cst = arith.constant 0.000000e+00 : f32
    %3 = vector.broadcast %cst : f32 to vector<8x128xf32>
    %4 = arith.subf %3, %2 : vector<8x128xf32>
    %5 = math.exp %4 : vector<8x128xf32>
    %6 = math.log1p %5 : vector<8x128xf32>
    %cst_3 = arith.constant 1.000000e+00 : f32
    %7 = vector.broadcast %cst_3 : f32 to vector<8x128xf32>
    %8 = arith.cmpf oeq, %1, %7 : vector<8x128xf32>
    %cst_4 = arith.constant 0.000000e+00 : f32
    %9 = vector.broadcast %cst_4 : f32 to vector<8x128xf32>
    %10 = arith.subf %9, %0 : vector<8x128xf32>
    %11 = arith.select %8, %0, %10 : vector<8x128xi1>, vector<8x128xf32>
    %cst_5 = arith.constant 0.000000e+00 : f32
    %12 = vector.broadcast %cst_5 : f32 to vector<8x128xf32>
    %13 = arith.maximumf %11, %12 : vector<8x128xf32>
    %14 = arith.addf %13, %6 : vector<8x128xf32>
    %cst_6 = arith.constant 0.000000e+00 : f32
    %15 = vector.broadcast %cst_6 : f32 to vector<8x128xf32>
    %16 = arith.subf %15, %14 : vector<8x128xf32>
    %17 = math.exp %16 : vector<8x128xf32>
    %cst_7 = arith.constant 5.000000e+00 : f32
    %18 = vector.broadcast %cst_7 : f32 to vector<8x128xf32>
    %19 = arith.mulf %18, %17 : vector<8x128xf32>
    %cst_8 = arith.constant 2.000000e+00 : f32
    %20 = vector.broadcast %cst_8 : f32 to vector<8x128xf32>
    %21 = arith.addf %20, %19 : vector<8x128xf32>
    %cst_9 = arith.constant 0.000000e+00 : f32
    %22 = vector.broadcast %cst_9 : f32 to vector<8x128xf32>
    %23 = arith.subf %22, %21 : vector<8x128xf32>
    %24 = arith.mulf %23, %14 : vector<8x128xf32>
    %25 = math.exp %24 : vector<8x128xf32>
    %cst_10 = arith.constant -5.000000e-01 : f32
    %26 = vector.broadcast %cst_10 : f32 to vector<8x128xf32>
    %27 = arith.mulf %26, %1 : vector<8x128xf32>
    %cst_11 = arith.constant 7.500000e-01 : f32
    %28 = vector.broadcast %cst_11 : f32 to vector<8x128xf32>
    %29 = arith.addf %28, %27 : vector<8x128xf32>
    %30 = arith.mulf %29, %25 : vector<8x128xf32>
    %cst_12 = arith.constant 0.000000e+00 : f32
    %31 = vector.broadcast %cst_12 : f32 to vector<8x128xf32>
    %32 = arith.maximumf %0, %31 : vector<8x128xf32>
    %33 = arith.mulf %0, %1 : vector<8x128xf32>
    %34 = arith.subf %32, %33 : vector<8x128xf32>
    %35 = arith.addf %34, %6 : vector<8x128xf32>
    %36 = arith.mulf %30, %35 : vector<8x128xf32>
    %37 = vector.shape_cast %36 : vector<8x128xf32> to vector<1x8x128xf32>
    %cst_13 = arith.constant dense<0.000000e+00> : vector<8x128xf32>
    %38 = vector.multi_reduction <add>, %37, %cst_13 [0] : vector<1x8x128xf32> to vector<8x128xf32>
    %c0_14 = arith.constant 0 : index
    %c0_15 = arith.constant 0 : index
    %39 = vector.load %arg3[%c0_14, %c0_15] : memref<8x128xf32, #tpu.memory_space<vmem>>, vector<8x128xf32>
    tpu.vector_store %arg3[%c0_14, %c0_15], %38 {strides = array<i32>} : memref<8x128xf32, #tpu.memory_space<vmem>>, vector<8x128xf32>,
    return
  }
  func.func @transform_0(%arg0: i32) -> (i32, i32) {
    %c0_i32 = arith.constant 0 : i32
    %c0_i32_0 = arith.constant 0 : i32
    return %arg0, %c0_i32 : i32, i32
  }
  func.func @transform_1(%arg0: i32) -> (i32, i32) {
    %c0_i32 = arith.constant 0 : i32
    %c0_i32_0 = arith.constant 0 : i32
    return %arg0, %c0_i32 : i32, i32
  }
  func.func @transform_2(%arg0: i32) -> (i32, i32) {
    %c0_i32 = arith.constant 0 : i32
    %c0_i32_0 = arith.constant 0 : i32
    return %arg0, %c0_i32 : i32, i32
  }
}

</mosaic_0001>

<llo_original>
// kernel: tpu_custom_call.1
$region0: #{tpu_custom_call.1}
  #allocation0 [shape = 'u32[]', space=smem, size = 0x4, offset = 0x4, fixed_abs, tag = 'smem constant byte address 0x4 - core index']
  #allocation1 [shape = 'u32[72,128]{1,0:T(1,128)}', space=vmem, size = 0x9000, scoped, tag = 'internal scratch']
  %s0 = inlined_call_operand.hbm [shape: f32[16,128], index: 0, kind: input, shape index: {}]
  %s1 = inlined_call_operand.hbm [shape: f32[16,128], index: 1, kind: input, shape index: {}]
  %s2 = inlined_call_operand.hbm [shape: f32[16,128], index: 2, kind: output, shape index: {}]
  %s3 = sld [smem:[#allocation0]]
  $region49: #{tpu_custom_call.1} parent=0
    _
  %s5 = ssub.s32 1, %s3
  %s6 = scalar_select 0, %s5, %s3
  $region1: #{tpu_custom_call.1} parent=0
    #allocation2 [shape = 'u8[8192]{0}', space=vmem, size = 0x2000, scoped, tag = 'input window, operand 0']
    #allocation3 [shape = 's32[2]{0}', space=sflag, size = 0x8, scoped, tag = 'scoped memory for tpu_custom_call.1']
    #allocation4 [shape = 's32[2]{0}', space=sflag, size = 0x8, scoped, tag = 'scoped memory for tpu_custom_call.1']
    #allocation5 [shape = 'u8[8192]{0}', space=vmem, size = 0x2000, scoped, tag = 'input window, operand 1']
    #allocation6 [shape = 's32[2]{0}', space=sflag, size = 0x8, scoped, tag = 'scoped memory for tpu_custom_call.1']
    #allocation7 [shape = 'u8[8192]{0}', space=vmem, size = 0x2000, scoped, tag = 'output window, operand 0']
    %7 = vsyncpa [#allocation3], 0
    %s8 = scalar_lea.sflag [#allocation3], 1
    %9 = vsyncpa %s8, 0
    %10 = vsyncpa [#allocation6], 0
    %s11 = scalar_lea.sflag [#allocation6], 1
    %12 = vsyncpa %s11, 0
    %13 = vsyncpa [#allocation4], 0
    %s14 = scalar_lea.sflag [#allocation4], 1
    %15 = vsyncpa %s14, 0
    loop: start=0, step=1, limit=4
    $region2: #{tpu_custom_call.1} parent=1 // loop_pre_header
      _
    $region3: #{tpu_custom_call.1} parent=1 // loop_header
      %s17 = sphi 0, %s21
      %p18 = scmp.ge.s32.totalorder %s17, 4
      %s27 = sphi 0, %s29
      %s30 = sphi 0, %s27
      %s31 = sphi 0, %s30
      %s47 = sphi 0, %s31
      %s53 = sphi 0, %s55
      %s56 = sphi 0, %s53
      %s57 = sphi 0, %s56
      %s73 = sphi 0, %s57
      %s79 = sphi 0, %s81
      %s82 = sphi 0, %s79
      %s83 = sphi 0, %s82
      %s99 = sphi 0, %s83
    $region4: #{tpu_custom_call.1} parent=1 // loop_header_branch
      %20 = sbr.rel (%p18) target = $region8
    $region5: #{tpu_custom_call.1} parent=1 // loop_body
      %s22 = ssub.s32 %s17, 1
      %s23 = ssub.s32 %s17, 2
      %s24 = sadd.s32 %s17, 1
      %s25 = ssub.s32 %s17, %s24
      %p26 = scmp.eq.s32.totalorder %s25, 0
      %s28 = sadd.s32 %s27, 1
      %s29 = scalar_select %p26, %s27, %s28
      %p32 = pneg %p26
      %p33 = scmp.eq.s32.totalorder %s17, 1
      %p34 = por %p32, %p33
      %p35 = scmp.ne.s32.totalorder %s27, %s30
      %p36 = scmp.eq.s32.totalorder %s17, 0
      %p37 = por %p35, %p36
      %p38 = scmp.ne.s32.totalorder %s27, %s30
      %p39 = scmp.eq.s32.totalorder %s22, 1
      %p40 = por %p38, %p39
      %p41 = scmp.ne.s32.totalorder %s30, %s31
      %p42 = scmp.eq.s32.totalorder %s22, 0
      %p43 = por %p41, %p42
      %p44 = scmp.ne.s32.totalorder %s30, %s31
      %p45 = scmp.eq.s32.totalorder %s23, 1
      %p46 = por %p44, %p45
      %p48 = scmp.ne.s32.totalorder %s31, %s47
      %p49 = scmp.eq.s32.totalorder %s23, 0
      %p50 = por %p48, %p49
      %s51 = ssub.s32 %s17, %s24
      %p52 = scmp.eq.s32.totalorder %s51, 0
      %s54 = sadd.s32 %s53, 1
      %s55 = scalar_select %p52, %s53, %s54
      %p58 = pneg %p52
      %p59 = scmp.eq.s32.totalorder %s17, 1
      %p60 = por %p58, %p59
      %p61 = scmp.ne.s32.totalorder %s53, %s56
      %p62 = scmp.eq.s32.totalorder %s17, 0
      %p63 = por %p61, %p62
      %p64 = scmp.ne.s32.totalorder %s53, %s56
      %p65 = scmp.eq.s32.totalorder %s22, 1
      %p66 = por %p64, %p65
      %p67 = scmp.ne.s32.totalorder %s56, %s57
      %p68 = scmp.eq.s32.totalorder %s22, 0
      %p69 = por %p67, %p68
      %p70 = scmp.ne.s32.totalorder %s56, %s57
      %p71 = scmp.eq.s32.totalorder %s23, 1
      %p72 = por %p70, %p71
      %p74 = scmp.ne.s32.totalorder %s57, %s73
      %p75 = scmp.eq.s32.totalorder %s23, 0
      %p76 = por %p74, %p75
      %s77 = ssub.s32 %s17, %s24
      %p78 = scmp.eq.s32.totalorder %s77, 0
      %s80 = sadd.s32 %s79, 1
      %s81 = scalar_select %p78, %s79, %s80
      %p84 = pneg %p78
      %p85 = scmp.eq.s32.totalorder %s17, 1
      %p86 = por %p84, %p85
      %p87 = scmp.ne.s32.totalorder %s79, %s82
      %p88 = scmp.eq.s32.totalorder %s17, 0
      %p89 = por %p87, %p88
      %p90 = scmp.ne.s32.totalorder %s79, %s82
      %p91 = scmp.eq.s32.totalorder %s22, 1
      %p92 = por %p90, %p91
      %p93 = scmp.ne.s32.totalorder %s82, %s83
      %p94 = scmp.eq.s32.totalorder %s22, 0
      %p95 = por %p93, %p94
      %p96 = scmp.ne.s32.totalorder %s82, %s83
      %p97 = scmp.eq.s32.totalorder %s23, 1
      %p98 = por %p96, %p97
      %p100 = scmp.ne.s32.totalorder %s83, %s99
      %p101 = scmp.eq.s32.totalorder %s23, 0
      %p102 = por %p100, %p101
      %p103 = scmp.le.s32.totalorder 1, %s17
      %p104 = scmp.lt.s32.totalorder %s17, 3
      %p105 = pnand %p103, %p104
      %p106 = pneg %p105
      // Predicated region
      $region9: #{tpu_custom_call.1} parent=5 // pred_check
        _
      $region10: #{tpu_custom_call.1} parent=5 // pred_check_branch
        %108 = sbr.rel (%p105) target = $region12
      $region11: #{tpu_custom_call.1} parent=5 // pred_region
        %s109 = ssub.s32 %s17, 1
      $region12: #{tpu_custom_call.1} parent=5 // pred_fallthru
        _
      %p110 = scmp.lt.s32.totalorder %s17, 2
      // Predicated region
      $region13: #{tpu_custom_call.1} parent=5 // pred_check
        %p111 = pneg %p110
      $region14: #{tpu_custom_call.1} parent=5 // pred_check_branch
        %113 = sbr.rel (%p111) target = $region16
      $region15: #{tpu_custom_call.1} parent=5 // pred_region
        // Predicated region
        $region17: #{tpu_custom_call.1} parent=15 // pred_check
          %p114 = pneg %p37
        $region18: #{tpu_custom_call.1} parent=15 // pred_check_branch
          %116 = sbr.rel (%p114) target = $region20
        $region19: #{tpu_custom_call.1} parent=15 // pred_region
          %s117 = sand.u32 %s27, 1
          %s118 = scalar_lea.sflag [#allocation3], %s117
          %s119 = sand.u32 %s27, 1
          %s120 = smul.addr %s119, 8
          %s121 = scalar_lea.vmem [#allocation2], %s120
          %123 = vsyncadd %s118, 0
          %s124 = smul.addr %s17, 8
          %s125 = scalar_lea.hbm %s0, %s124
          %s127 = sshll.u32 %s125, 4
          %s128 = int_to_ptr.hbm [resolvable:$true] %s127
          %s129 = sshll.u32 %s121, 4
          %s130 = int_to_ptr.vmem [resolvable:$true] %s129
          %132 = dma.hbm_to_vmem [thread:$0]  %s128, 128, %s130, %s118
        $region20: #{tpu_custom_call.1} parent=15 // pred_fallthru
          _
        // Predicated region
        $region21: #{tpu_custom_call.1} parent=15 // pred_check
          %p133 = pneg %p63
        $region22: #{tpu_custom_call.1} parent=15 // pred_check_branch
          %135 = sbr.rel (%p133) target = $region24
        $region23: #{tpu_custom_call.1} parent=15 // pred_region
          %s136 = sand.u32 %s53, 1
          %s137 = scalar_lea.sflag [#allocation6], %s136
          %s138 = sand.u32 %s53, 1
          %s139 = smul.addr %s138, 8
          %s140 = scalar_lea.vmem [#allocation5], %s139
          %142 = vsyncadd %s137, 0
          %s143 = smul.addr %s17, 8
          %s144 = scalar_lea.hbm %s1, %s143
          %s146 = sshll.u32 %s144, 4
          %s147 = int_to_ptr.hbm [resolvable:$true] %s146
          %s148 = sshll.u32 %s140, 4
          %s149 = int_to_ptr.vmem [resolvable:$true] %s148
          %151 = dma.hbm_to_vmem [thread:$0]  %s147, 128, %s149, %s137
        $region24: #{tpu_custom_call.1} parent=15 // pred_fallthru
          _
      $region16: #{tpu_custom_call.1} parent=5 // pred_fallthru
        _
      %p152 = scmp.le.s32.totalorder 1, %s17
      %p153 = scmp.lt.s32.totalorder %s17, 3
      %p154 = pnand %p152, %p153
      %p155 = pneg %p154
      // Predicated region
      $region25: #{tpu_custom_call.1} parent=5 // pred_check
        _
      $region26: #{tpu_custom_call.1} parent=5 // pred_check_branch
        %157 = sbr.rel (%p154) target = $region28
      $region27: #{tpu_custom_call.1} parent=5 // pred_region
        %s158 = ssub.s32 %s17, 1
        %s159 = sand.u32 %s30, 1
        %s160 = scalar_lea.sflag [#allocation3], %s159
        %s161 = sand.u32 %s30, 1
        %s162 = smul.addr %s161, 8
        %s163 = scalar_lea.vmem [#allocation2], %s162
        // Predicated region
        $region29: #{tpu_custom_call.1} parent=27 // pred_check
          %p164 = pneg %p43
        $region30: #{tpu_custom_call.1} parent=27 // pred_check_branch
          %166 = sbr.rel (%p164) target = $region32
        $region31: #{tpu_custom_call.1} parent=27 // pred_region
          %168 = dma.done %s160, 128
        $region32: #{tpu_custom_call.1} parent=27 // pred_fallthru
          _
        %s169 = sand.u32 %s56, 1
        %s170 = scalar_lea.sflag [#allocation6], %s169
        %s171 = sand.u32 %s56, 1
        %s172 = smul.addr %s171, 8
        %s173 = scalar_lea.vmem [#allocation5], %s172
        // Predicated region
        $region33: #{tpu_custom_call.1} parent=27 // pred_check
          %p174 = pneg %p69
        $region34: #{tpu_custom_call.1} parent=27 // pred_check_branch
          %176 = sbr.rel (%p174) target = $region36
        $region35: #{tpu_custom_call.1} parent=27 // pred_region
          %178 = dma.done %s170, 128
        $region36: #{tpu_custom_call.1} parent=27 // pred_fallthru
          _
        %s179 = sand.u32 %s30, 1
        %s180 = scalar_lea.sflag [#allocation3], %s179
        %s181 = sand.u32 %s30, 1
        %s182 = smul.addr %s181, 8
        %s183 = scalar_lea.vmem [#allocation2], %s182
        %p184 = pneg %p43
        %p185 = pneg %p40
        %s186 = sand.u32 %s56, 1
        %s187 = scalar_lea.sflag [#allocation6], %s186
        %s188 = sand.u32 %s56, 1
        %s189 = smul.addr %s188, 8
        %s190 = scalar_lea.vmem [#allocation5], %s189
        %p191 = pneg %p69
        %p192 = pneg %p66
        %p193 = pneg %p95
        %p194 = pneg %p92
        %s195 = sand.u32 %s82, 1
        %s196 = scalar_lea.sflag [#allocation4], %s195
        %s197 = sand.u32 %s82, 1
        %s198 = smul.addr %s197, 8
        %s199 = scalar_lea.vmem [#allocation7], %s198
        %v200 = vld [vmem:[%s163] sm:$0xff]
        %v201 = vld [vmem:[%s173] sm:$0xff]
        %v202 = vand.u32 2147483647, %v200
        %v203 = vsub.f32 0.0, %v202
        %v204 = vmul.f32 %v203, 1.442695
        %v205 = vpow.pop %v204
        %v206 = vadd.f32 %v205, 1.0
        %v207 = vlog2.pop %v206
        %v208 = vmul.f32 %v207, 0.6931472
        %v209 = vmul.f32 -0.5, %v205
        %v210 = vadd.f32 %v209, 1.0
        %v211 = vmul.f32 %v210, %v205
        %v212 = vand.u32 2147483647, %v205
        %vm213 = vcmp.lt.f32.partialorder %v212, 0.0004427343
        %v214 = vsel %vm213, %v211, %v208
        %vm215 = vcmp.eq.f32.partialorder %v201, 1.0
        %v216 = vsub.f32 0.0, %v200
        %v217 = vsel %vm215, %v200, %v216
        %v218 = vmax.f32 %v217, 0.0
        %v219 = vadd.f32 %v218, %v214
        %v220 = vsub.f32 0.0, %v219
        %v221 = vmul.f32 %v220, 1.442695
        %v222 = vpow.pop %v221
        %v223 = vmul.f32 %v222, 5.0
        %v224 = vadd.f32 %v223, 2.0
        %v225 = vsub.f32 0.0, %v224
        %v226 = vmul.f32 %v225, %v219
        %v227 = vmul.f32 %v226, 1.442695
        %v228 = vpow.pop %v227
        %v229 = vmul.f32 %v201, -0.5
        %v230 = vadd.f32 %v229, 0.75
        %v231 = vmul.f32 %v230, %v228
        %v232 = vmax.f32 %v200, 0.0
        %v233 = vmul.f32 %v200, %v201
        %v234 = vsub.f32 %v232, %v233
        %v235 = vadd.f32 %v234, %v214
        %v236 = vmul.f32 %v231, %v235
        %v237 = vadd.f32 %v236, 0.0
        %238 = vst [vmem:[%s199] sm:$0xff] %v237
        %s239 = sand.u32 %s82, 1
        %s240 = scalar_lea.sflag [#allocation4], %s239
        %s241 = sand.u32 %s82, 1
        %s242 = smul.addr %s241, 8
        %s243 = scalar_lea.vmem [#allocation7], %s242
        // Predicated region
        $region37: #{tpu_custom_call.1} parent=27 // pred_check
          %p244 = pneg %p92
        $region38: #{tpu_custom_call.1} parent=27 // pred_check_branch
          %246 = sbr.rel (%p244) target = $region40
        $region39: #{tpu_custom_call.1} parent=27 // pred_region
          %248 = vsyncadd %s240, 0
          %s249 = smul.addr %s22, 8
          %s250 = scalar_lea.hbm %s2, %s249
          %s252 = sshll.u32 %s243, 4
          %s253 = int_to_ptr.vmem [resolvable:$true] %s252
          %s254 = sshll.u32 %s250, 4
          %s255 = int_to_ptr.hbm [resolvable:$true] %s254
          %257 = dma.vmem_to_hbm [thread:$0]  %s253, 128, %s255, %s240
        $region40: #{tpu_custom_call.1} parent=27 // pred_fallthru
          _
      $region28: #{tpu_custom_call.1} parent=5 // pred_fallthru
        _
      %p258 = scmp.le.s32.totalorder 2, %s17
      // Predicated region
      $region41: #{tpu_custom_call.1} parent=5 // pred_check
        %p259 = pneg %p258
      $region42: #{tpu_custom_call.1} parent=5 // pred_check_branch
        %261 = sbr.rel (%p259) target = $region44
      $region43: #{tpu_custom_call.1} parent=5 // pred_region
        %s262 = ssub.s32 %s17, 2
        // Predicated region
        $region45: #{tpu_custom_call.1} parent=43 // pred_check
          %p263 = pneg %p98
        $region46: #{tpu_custom_call.1} parent=43 // pred_check_branch
          %265 = sbr.rel (%p263) target = $region48
        $region47: #{tpu_custom_call.1} parent=43 // pred_region
          %s266 = sand.u32 %s83, 1
          %s267 = scalar_lea.sflag [#allocation4], %s266
          %s268 = sand.u32 %s83, 1
          %s269 = smul.addr %s268, 8
          %s270 = scalar_lea.vmem [#allocation7], %s269
          %272 = dma.done %s267, 128
        $region48: #{tpu_custom_call.1} parent=43 // pred_fallthru
          _
      $region44: #{tpu_custom_call.1} parent=5 // pred_fallthru
        _
    $region6: #{tpu_custom_call.1} parent=1 // loop_footer
      %s21 = sadd.s32 1, %s17
    $region7: #{tpu_custom_call.1} parent=1 // loop_footer_branch
      %16 = sbr.rel target = $region3
    $region8: #{tpu_custom_call.1} parent=1 // loop_exit
      _
    %273 = vsyncpa [#allocation3], 1
    %s274 = scalar_lea.sflag [#allocation3], 1
    %275 = vsyncpa %s274, 1
    %276 = vsyncpa [#allocation6], 1
    %s277 = scalar_lea.sflag [#allocation6], 1
    %278 = vsyncpa %s277, 1
    %279 = vsyncpa [#allocation4], 1
    %s280 = scalar_lea.sflag [#allocation4], 1
    %281 = vsyncpa %s280, 1

</llo_original>
